<compile_context>
chip_gen: v5e
topology: v5e:2x2
jax: 0.10.0
libtpu: 0.0.40
codegen_flags: <defaults>
</compile_context>

<pallas_src>
import functools

import jax
import jax.numpy as jnp
from jax.experimental import pallas as pl
from jax.experimental.pallas import tpu as pltpu


_LANE = 512        # lane-dense last dim (4 x 128 lanes)
_MAX_ROWS = 1024   # ~2 MiB per array per block at _LANE=512, f32


def _cdiv(a, b):
    return -(-a // b)


def _round_up(a, b):
    return _cdiv(a, b) * b


# ---------------------------------------------------------------------------
# Kernel: out = mu + eps * sqrt(var) * var_coef   (elementwise, f32 math)
# ---------------------------------------------------------------------------
def _reparam_kernel(mu_ref, var_ref, eps_ref, out_ref, *, var_coef):
    mu = mu_ref[...].astype(jnp.float32)
    var = var_ref[...].astype(jnp.float32)
    eps = eps_ref[...].astype(jnp.float32)
    out_ref[...] = (mu + eps * jnp.sqrt(var) * var_coef).astype(out_ref.dtype)


def _reparameterize_slab(mu2d, var2d, eps2d, var_coef):
    """Run the kernel over a lane-dense [Rp, _LANE] slab."""
    Rp, L = mu2d.shape

    # Pick the number of blocks, then a block height rounded up to 8 rows so
    # the (8, 128) block constraint is satisfied with at most 7 rows of slack
    # (the last block may be partial; the op is elementwise so that is safe).
    nblocks = _cdiv(Rp, _MAX_ROWS)
    tile_r = _round_up(_cdiv(Rp, nblocks), 8)
    if tile_r >= Rp:
        tile_r = Rp          # single block == full rows dim (always legal)
    grid = (_cdiv(Rp, tile_r),)

    spec = pl.BlockSpec((tile_r, L), lambda i: (i, 0))

    # Donate the noise buffer to the output (it is freshly generated and never
    # reused).  Only do this when the grid divides evenly so there is no
    # partial-block read/write interplay with the aliased buffer.
    aliases = {2: 0} if Rp % tile_r == 0 else {}

    kernel = functools.partial(_reparam_kernel, var_coef=float(var_coef))
    return pl.pallas_call(
        kernel,
        out_shape=jax.ShapeDtypeStruct((Rp, L), mu2d.dtype),
        grid=grid,
        in_specs=[spec, spec, spec],
        out_specs=spec,
        input_output_aliases=aliases,
        compiler_params=pltpu.CompilerParams(
            dimension_semantics=("parallel",),
            vmem_limit_bytes=32 * 1024 * 1024,
        ),
    )(mu2d, var2d, eps2d)


def reparameterize(mu, var, key, var_coef):
    """Pallas-backed: mu + randn * sqrt(var) * var_coef, arbitrary shape."""
    orig_shape = mu.shape
    N = mu.size
    R = _cdiv(N, _LANE)

    # Noise is generated directly at slab shape (no pad / reshape copies).
    eps2d = jax.random.normal(key, (R, _LANE), dtype=mu.dtype)

    if N % _LANE == 0:
        # Common case: free reshape into the lane-dense slab, no pad, no slice.
        mu2d = jnp.reshape(mu, (R, _LANE))
        var2d = jnp.reshape(var, (R, _LANE))
        out2d = _reparameterize_slab(mu2d, var2d, eps2d, var_coef)
        return out2d.reshape(orig_shape)

    # Ragged tail: pad the flat arrays only to the next multiple of _LANE
    # (< 512 extra elements).  sqrt(0) = 0 in the pad region, so no NaNs.
    pad = R * _LANE - N
    mu2d = jnp.pad(jnp.ravel(mu), (0, pad)).reshape(R, _LANE)
    var2d = jnp.pad(jnp.ravel(var), (0, pad)).reshape(R, _LANE)
    out2d = _reparameterize_slab(mu2d, var2d, eps2d, var_coef)
    return out2d.reshape(-1)[:N].reshape(orig_shape)


# ---------------------------------------------------------------------------
# VAE module (JAX / Pallas version of the PyTorch nn.Module)
# ---------------------------------------------------------------------------
class VAE:
    name = "vae"

    def __init__(self, var_coef=1.0, eval_vae=False):
        self.var_coef = var_coef
        self.eval_vae = eval_vae

    def forward(self, mode="train", mu=None, var=None, latent_size=None, key=None):
        # TODO(synk): the torch 'device' argument has no JAX equivalent; an
        # explicit PRNG key replaces torch's global RNG state.
        if mode == "generate":
            # torch.randn(size=latent_size): pure sampling, no fused math —
            # a kernel launch would only add HBM traffic, so stay in JAX.
            return jax.random.normal(key, tuple(latent_size), dtype=jnp.float32)
        if mode == "train" or self.eval_vae:
            return reparameterize(mu, var, key, self.var_coef)
        # eval mode without eval_vae: latent = mu (no compute needed).
        return mu

    __call__ = forward


# ---------------------------------------------------------------------------
# Smoke test
# ---------------------------------------------------------------------------
if __name__ == "__main__":
    key = jax.random.PRNGKey(0)
    k_mu, k_var, k_train, k_gen, k_rag = jax.random.split(key, 5)

    # Lane-aligned shapes: batch=2, seq=8, hidden=32  -> N = 512 (no pad path).
    B, S, H = 2, 8, 32
    mu = jax.random.normal(k_mu, (B, S, H), dtype=jnp.float32)
    var = jnp.abs(jax.random.normal(k_var, (B, S, H), dtype=jnp.float32)) + 0.1

    var_coef = 0.5
    vae = VAE(var_coef=var_coef, eval_vae=False)

    # train mode: mu + N(0,1) * sqrt(var) * var_coef  (Pallas kernel)
    latent = jax.block_until_ready(vae("train", mu=mu, var=var, key=k_train))
    assert latent.shape == (B, S, H)
    assert bool(jnp.all(jnp.isfinite(latent)))

    # Exact reference (noise stream is jax.random.normal over the [R, 512] slab).
    eps_ref = jax.random.normal(k_train, (mu.size // _LANE, _LANE), jnp.float32)
    ref = mu + eps_ref.reshape(mu.shape) * jnp.sqrt(var) * var_coef
    assert jnp.allclose(latent, ref, atol=1e-5, rtol=1e-5)

    # Determinism: same key -> identical latent.
    latent2 = jax.block_until_ready(vae("train", mu=mu, var=var, key=k_train))
    assert jnp.array_equal(latent, latent2)

    # eval mode (eval_vae=False): latent == mu, no kernel.
    latent_eval = jax.block_until_ready(vae("eval", mu=mu, var=var, key=k_train))
    assert jnp.allclose(latent_eval, mu)

    # eval mode with eval_vae=True goes through the kernel as well.
    vae_eval = VAE(var_coef=var_coef, eval_vae=True)
    latent_ev = jax.block_until_ready(vae_eval("eval", mu=mu, var=var, key=k_train))
    assert latent_ev.shape == (B, S, H)
    assert jnp.allclose(latent_ev, ref, atol=1e-5, rtol=1e-5)

    # Ragged shape (N not a multiple of 512) exercises the minimal-pad path.
    mu_r = jax.random.normal(k_rag, (3, 5, 7), dtype=jnp.float32)
    var_r = jnp.abs(jax.random.normal(k_rag, (3, 5, 7), dtype=jnp.float32)) + 0.1
    lat_r = jax.block_until_ready(vae("train", mu=mu_r, var=var_r, key=k_train))
    assert lat_r.shape == (3, 5, 7)
    assert bool(jnp.all(jnp.isfinite(lat_r)))

    # generate mode: standard normal of latent_size (wrapper-level sampling).
    gen = jax.block_until_ready(vae("generate", latent_size=(B, S, H), key=k_gen))
    assert gen.shape == (B, S, H)

    print("KERNEL_OK")
</pallas_src>

<mosaic_0001>
module attributes {stable_mosaic.version = 11 : i64} {
  func.func @_reparam_kernel(%arg0: i32, %arg1: memref<1x512xf32, #tpu.memory_space<vmem>>, %arg2: memref<1x512xf32, #tpu.memory_space<vmem>>, %arg3: memref<1x512xf32, #tpu.memory_space<vmem>>, %arg4: memref<1x512xf32, #tpu.memory_space<vmem>>) attributes {dimension_semantics = [#tpu.dimension_semantics<parallel>], iteration_bounds = array<i64: 1>, scalar_prefetch = 0 : i64, scratch_operands = 0 : i64, tpu.core_type = #tpu.core_type<tc>, window_params = [{transform_indices = @transform_0, window_bounds = array<i64: 1, 512>}, {transform_indices = @transform_1, window_bounds = array<i64: 1, 512>}, {transform_indices = @transform_2, window_bounds = array<i64: 1, 512>}, {transform_indices = @transform_3, window_bounds = array<i64: 1, 512>}]} {
    %c0 = arith.constant 0 : index
    %c0_0 = arith.constant 0 : index
    %0 = vector.load %arg1[%c0, %c0_0] : memref<1x512xf32, #tpu.memory_space<vmem>>, vector<1x512xf32>
    %c0_1 = arith.constant 0 : index
    %c0_2 = arith.constant 0 : index
    %1 = vector.load %arg2[%c0_1, %c0_2] : memref<1x512xf32, #tpu.memory_space<vmem>>, vector<1x512xf32>
    %c0_3 = arith.constant 0 : index
    %c0_4 = arith.constant 0 : index
    %2 = vector.load %arg3[%c0_3, %c0_4] : memref<1x512xf32, #tpu.memory_space<vmem>>, vector<1x512xf32>
    %3 = math.sqrt %1 : vector<1x512xf32>
    %4 = arith.mulf %2, %3 : vector<1x512xf32>
    %cst = arith.constant 5.000000e-01 : f32
    %5 = vector.broadcast %cst : f32 to vector<1x512xf32>
    %6 = arith.mulf %4, %5 : vector<1x512xf32>
    %7 = arith.addf %0, %6 : vector<1x512xf32>
    %c0_5 = arith.constant 0 : index
    %c0_6 = arith.constant 0 : index
    %8 = vector.load %arg4[%c0_5, %c0_6] : memref<1x512xf32, #tpu.memory_space<vmem>>, vector<1x512xf32>
    tpu.vector_store %arg4[%c0_5, %c0_6], %7 {strides = array<i32>} : memref<1x512xf32, #tpu.memory_space<vmem>>, vector<1x512xf32>,
    return
  }
  func.func @transform_0(%arg0: i32) -> (i32, i32) {
    %c0_i32 = arith.constant 0 : i32
    %c0_i32_0 = arith.constant 0 : i32
    return %arg0, %c0_i32 : i32, i32
  }
  func.func @transform_1(%arg0: i32) -> (i32, i32) {
    %c0_i32 = arith.constant 0 : i32
    %c0_i32_0 = arith.constant 0 : i32
    return %arg0, %c0_i32 : i32, i32
  }
  func.func @transform_2(%arg0: i32) -> (i32, i32) {
    %c0_i32 = arith.constant 0 : i32
    %c0_i32_0 = arith.constant 0 : i32
    return %arg0, %c0_i32 : i32, i32
  }
  func.func @transform_3(%arg0: i32) -> (i32, i32) {
    %c0_i32 = arith.constant 0 : i32
    %c0_i32_0 = arith.constant 0 : i32
    return %arg0, %c0_i32 : i32, i32
  }
}

</mosaic_0001>

<llo_original>
// kernel: tpu_custom_call.1
$region0: #{tpu_custom_call.1}
  #allocation0 [shape = 'u32[]', space=smem, size = 0x4, offset = 0x4, fixed_abs, tag = 'smem constant byte address 0x4 - core index']
  #allocation1 [shape = 'u32[72,128]{1,0:T(1,128)}', space=vmem, size = 0x9000, scoped, tag = 'internal scratch']
  %s0 = inlined_call_operand.vmem [shape: f32[1,512], index: 0, kind: input, shape index: {}]
  %s1 = inlined_call_operand.vmem [shape: f32[1,512], index: 1, kind: input, shape index: {}]
  %s2 = inlined_call_operand.hbm [shape: f32[1,512], index: 2, kind: input, shape index: {}, may-alias: {2,3}]
  %s3 = inlined_call_operand.hbm [shape: f32[1,512], index: 3, kind: output, shape index: {}, may-alias: {2,3}]
  %s4 = sld [smem:[#allocation0]]
  $region26: #{tpu_custom_call.1} parent=0
    _
  %s6 = ssub.s32 1, %s4
  %s7 = scalar_select 0, %s6, %s4
  $region1: #{tpu_custom_call.1} parent=0
    #allocation2 [shape = 'u8[2048]{0}', space=vmem, size = 0x800, scoped, tag = 'input window, operand 2, single buffered']
    #allocation3 [shape = 's32[1]{0}', space=sflag, size = 0x4, scoped, tag = 'scoped memory for tpu_custom_call.1']
    #allocation4 [shape = 's32[1]{0}', space=sflag, size = 0x4, scoped, tag = 'scoped memory for tpu_custom_call.1']
    #allocation5 [shape = 'u8[2048]{0}', space=vmem, size = 0x800, scoped, tag = 'output window, operand 0, single buffered']
    %8 = vsyncpa [#allocation3], 0
    %9 = vsyncpa [#allocation4], 0
    // Predicated region
    $region2: #{tpu_custom_call.1} parent=1 // pred_check
      _
    $region3: #{tpu_custom_call.1} parent=1 // pred_check_branch
      %11 = sbr.rel (0) target = $region5
    $region4: #{tpu_custom_call.1} parent=1 // pred_region
      _
    $region5: #{tpu_custom_call.1} parent=1 // pred_fallthru
      _
    // Predicated region
    $region6: #{tpu_custom_call.1} parent=1 // pred_check
      _
    $region7: #{tpu_custom_call.1} parent=1 // pred_check_branch
      %13 = sbr.rel (0) target = $region9
    $region8: #{tpu_custom_call.1} parent=1 // pred_region
      _
    $region9: #{tpu_custom_call.1} parent=1 // pred_fallthru
      _
    // Predicated region
    $region10: #{tpu_custom_call.1} parent=1 // pred_check
      _
    $region11: #{tpu_custom_call.1} parent=1 // pred_check_branch
      %15 = sbr.rel (0) target = $region13
    $region12: #{tpu_custom_call.1} parent=1 // pred_region
      %17 = vsyncadd [#allocation3], 0
      %s19 = sshll.u32 %s2, 4
      %s20 = int_to_ptr.hbm [resolvable:$true] %s19
      %s21 = sshll.u32 [#allocation2], 4
      %s22 = int_to_ptr.vmem [resolvable:$true] %s21
      %24 = dma.hbm_to_vmem [thread:$0]  %s20, 64, %s22, [#allocation3]
    $region13: #{tpu_custom_call.1} parent=1 // pred_fallthru
      _
    // Predicated region
    $region14: #{tpu_custom_call.1} parent=1 // pred_check
      _
    $region15: #{tpu_custom_call.1} parent=1 // pred_check_branch
      %26 = sbr.rel (0) target = $region17
    $region16: #{tpu_custom_call.1} parent=1 // pred_region
      %28 = dma.done [#allocation3], 64
    $region17: #{tpu_custom_call.1} parent=1 // pred_fallthru
      _
    %v29 = vld [vmem:[%s0] sm:$0xf]
    %v30 = vld [vmem:[%s1] sm:$0xf]
    %v31 = vld [vmem:[#allocation2] sm:$0xf]
    %v32 = vrsqrt.pop %v30
    %v33 = vmul.f32 %v32, %v30
    %v34 = vmul.f32 %v33, %v32
    %v35 = vmul.f32 0.5, %v34
    %v36 = vsub.f32 1.5, %v35
    %v37 = vmul.f32 %v32, %v36
    %v38 = vmul.f32 %v30, %v37
    %vm39 = vcmp.eq.f32.partialorder %v30, inf
    %v40 = vsel %vm39, %v30, %v38
    %vm41 = vcmp.eq.f32.partialorder %v30, 0.0
    %v42 = vand.u32 %v30, 2147483648
    %v43 = vsel %vm41, %v42, %v40
    %v44 = vmul.f32 %v31, %v43
    %v45 = vmul.f32 %v44, 0.5
    %v46 = vadd.f32 %v29, %v45
    %v47 = vlaneseq
    %vm48 = vcmp.ge.s32.totalorder %v47, 0
    %vm49 = vcmp.lt.s32.totalorder %v47, 512
    %vm50 = vmand %vm48, %vm49
    %51 = vst.msk [vmem:[#allocation5] sm:$0xf] %vm50, %v46
    // Predicated region
    $region18: #{tpu_custom_call.1} parent=1 // pred_check
      _
    $region19: #{tpu_custom_call.1} parent=1 // pred_check_branch
      %53 = sbr.rel (0) target = $region21
    $region20: #{tpu_custom_call.1} parent=1 // pred_region
      %55 = vsyncadd [#allocation4], 0
      %s57 = sshll.u32 [#allocation5], 4
      %s58 = int_to_ptr.vmem [resolvable:$true] %s57
      %s59 = sshll.u32 %s3, 4
      %s60 = int_to_ptr.hbm [resolvable:$true] %s59
      %62 = dma.vmem_to_hbm [thread:$0]  %s58, 64, %s60, [#allocation4]
    $region21: #{tpu_custom_call.1} parent=1 // pred_fallthru
      _
    // Predicated region
    $region22: #{tpu_custom_call.1} parent=1 // pred_check
      _
    $region23: #{tpu_custom_call.1} parent=1 // pred_check_branch
      %64 = sbr.rel (0) target = $region25
    $region24: #{tpu_custom_call.1} parent=1 // pred_region
      %66 = dma.done [#allocation4], 64
    $region25: #{tpu_custom_call.1} parent=1 // pred_fallthru
      _
    %67 = vsyncpa [#allocation3], 1
    %68 = vsyncpa [#allocation4], 1

</llo_original>
